<compile_context>
chip_gen: v7x
topology: tpu7x:2x2x1
jax: 0.10.0
libtpu: 0.0.40
codegen_flags: <defaults>
</compile_context>

<pallas_src>
import functools

import jax
import jax.numpy as jnp
from jax.experimental import pallas as pl
from jax.experimental.pallas import tpu as pltpu


def _full_spec(shape):
    # whole-array block, trivial index map for grid=(1,)
    return pl.BlockSpec(shape, lambda i: (0,) * len(shape))


# ----------------------------- fused kernel -------------------------------- #

def _decoder_fused_kernel(n_layers, hidden_dim, din_pad,
                          tok_ref, state_ref, emb_ref, w_ref, b_ref,
                          wfc_ref, bfc_ref, pred_ref, state_out_ref):
    # tok_ref       : (B, 1)             int32
    # state_ref     : (B, L*2*H)         f32   [h_0 | c_0 | h_1 | c_1 | ...]
    # emb_ref       : (Vpad, E)          bf16  (rows >= V are zero)
    # w_ref         : (L, Din_pad+H, 4H) bf16  merged [w_ih ; w_hh] per layer
    # b_ref         : (L, 1, 4H)         f32   (b_ih + b_hh)
    # wfc_ref       : (H, Vpad)          bf16
    # bfc_ref       : (1, Vpad)          f32
    # pred_ref      : (B, Vpad)          f32
    # state_out_ref : (B, L*2*H)         f32   (aliased with state_ref's buffer)
    H = hidden_dim
    B = tok_ref.shape[0]
    Vp = emb_ref.shape[0]

    # --- embedding lookup: one-hot @ table on the MXU (Vpad = 128 lanes) ---- #
    tok = tok_ref[...]                                   # (B, 1) int32
    col = jax.lax.broadcasted_iota(jnp.int32, (B, Vp), 1)
    onehot = (col == tok).astype(emb_ref.dtype)          # (B, Vp) bf16 one-hot
    x = jnp.dot(onehot, emb_ref[...],
                preferred_element_type=jnp.float32)      # (B, E) f32
    # dropout(embedded) == identity in eval mode

    state = state_ref[...]                               # one (B, L*2*H) load
    new_state_parts = []

    # --- LSTM layers, unrolled; intermediates stay in VMEM/vregs ------------ #
    for l in range(n_layers):
        w = w_ref[l]                                     # (Din_pad+H, 4H) bf16
        bias = b_ref[l]                                  # (1, 4H) f32
        h_prev = state[:, l * 2 * H: l * 2 * H + H]      # (B, H) f32
        c_prev = state[:, l * 2 * H + H: (l + 1) * 2 * H]

        if x.shape[1] < din_pad:                         # static (trace-time) pad
            x = jnp.pad(x, ((0, 0), (0, din_pad - x.shape[1])))
        # single merged gate matmul: [x | h_prev] @ [w_ih ; w_hh]
        xh = jnp.concatenate([x, h_prev], axis=1)        # (B, Din_pad+H) f32
        gates = (jnp.dot(xh.astype(w.dtype), w,
                         preferred_element_type=jnp.float32)
                 + bias)                                 # (B, 4H) f32

        # PyTorch gate order: i, f, g, o.  sigmoid over the full tile,
        # tanh only on the g slice (no wasted EUP work).
        sig = jax.nn.sigmoid(gates)
        g = jnp.tanh(gates[:, 2 * H:3 * H])
        i = sig[:, 0 * H:1 * H]
        f = sig[:, 1 * H:2 * H]
        o = sig[:, 3 * H:4 * H]

        c_new = f * c_prev + i * g                       # f32 elementwise
        h_new = o * jnp.tanh(c_new)

        new_state_parts += [h_new, c_new]
        x = h_new                                        # inter-layer dropout == identity

    # one lane-dense (B, L*2*H) store instead of 2L masked partial stores
    state_out_ref[...] = jnp.concatenate(new_state_parts, axis=1)

    # --- fc_out (Vpad lane-dense) ------------------------------------------- #
    pred_ref[...] = (jnp.dot(x.astype(wfc_ref.dtype), wfc_ref[...],
                             preferred_element_type=jnp.float32)
                     + bfc_ref[...])


# ----------------------------- wrappers ------------------------------------- #

def pack_state(hidden, cell):
    """(L,B,H) h, (L,B,H) c -> (B, L*2*H) lane-dense slab [h_l | c_l] per layer."""
    L, B, H = hidden.shape
    hc = jnp.stack([hidden, cell], axis=1)               # (L, 2, B, H)
    return hc.transpose(2, 0, 1, 3).reshape(B, L * 2 * H)


def unpack_state(state, n_layers, hidden_dim):
    B = state.shape[0]
    st = state.reshape(B, n_layers, 2, hidden_dim).transpose(1, 2, 0, 3)
    return st[:, 0], st[:, 1]                            # (L,B,H), (L,B,H)


def decoder_step(tokens, state, params):
    """One fused decode step on the packed state slab.

    `state` (B, L*2*H) is aliased to the new-state output, so in an
    autoregressive loop the returned slab can be fed straight back.
    Returns (pred_padded (B, Vpad), new_state (B, L*2*H)).
    """
    B = tokens.shape[0]
    L = params["n_layers"]
    H = params["hidden_dim"]
    Dp = params["din_pad"]
    Vp = params["embedding"].shape[0]

    tok2d = tokens.astype(jnp.int32).reshape(B, 1)
    # TODO(synk): at production V, move tokens to scalar prefetch
    #             (PrefetchScalarGridSpec) and gather embedding rows from HBM.
    in_arrays = [tok2d, state, params["embedding"], params["w_gates"],
                 params["b_gates"], params["w_fc"], params["b_fc"]]
    in_specs = [_full_spec(a.shape) for a in in_arrays]

    out_shape = (jax.ShapeDtypeStruct((B, Vp), jnp.float32),
                 jax.ShapeDtypeStruct((B, L * 2 * H), jnp.float32))
    out_specs = (_full_spec((B, Vp)), _full_spec((B, L * 2 * H)))

    pred, new_state = pl.pallas_call(
        functools.partial(_decoder_fused_kernel, L, H, Dp),
        grid=(1,),
        in_specs=in_specs,
        out_specs=out_specs,
        out_shape=out_shape,
        input_output_aliases={1: 1},          # state slab updated in place
        compiler_params=pltpu.CompilerParams(
            dimension_semantics=("arbitrary",)),
    )(*in_arrays)
    return pred, new_state


def decoder_forward(tokens, hidden, cell, params):
    """Mirrors Decoder.forward (single-step, eval mode).

    tokens: (B,) int token ids; hidden/cell: (L, B, H).
    returns: prediction (B, V), hidden (L, B, H), cell (L, B, H)
    """
    state = pack_state(hidden, cell)
    pred, new_state = decoder_step(tokens, state, params)
    h_new, c_new = unpack_state(new_state, params["n_layers"],
                                params["hidden_dim"])
    return pred[:, :params["output_dim"]], h_new, c_new


# ----------------------------- param preparation ---------------------------- #

def prepare_params(embedding, w_ih_list, w_hh_list, b_ih_list, b_hh_list,
                   fc_w, fc_b, hidden_dim):
    """PyTorch-layout weights -> kernel layout (merged, stacked, padded)."""
    V, E = embedding.shape
    L = len(w_ih_list)
    H = hidden_dim
    Vp = ((V + 127) // 128) * 128
    din_pad = max(E, H)

    emb_p = jnp.zeros((Vp, E), jnp.float32).at[:V].set(embedding)
    emb_p = emb_p.astype(jnp.bfloat16)

    w_gates, b_gates = [], []
    for l in range(L):
        w_ih_t = w_ih_list[l].T                          # (Din_l, 4H)
        w_hh_t = w_hh_list[l].T                          # (H, 4H)
        din_l = w_ih_t.shape[0]
        w_ih_pad = jnp.zeros((din_pad, 4 * H), jnp.float32).at[:din_l].set(w_ih_t)
        w_gates.append(jnp.concatenate([w_ih_pad, w_hh_t], axis=0))
        b_gates.append((b_ih_list[l] + b_hh_list[l]).reshape(1, 4 * H))
    w_gates = jnp.stack(w_gates).astype(jnp.bfloat16)    # (L, din_pad+H, 4H)
    b_gates = jnp.stack(b_gates).astype(jnp.float32)     # (L, 1, 4H)

    w_fc = jnp.zeros((H, Vp), jnp.float32).at[:, :V].set(fc_w.T).astype(jnp.bfloat16)
    b_fc = jnp.zeros((1, Vp), jnp.float32).at[:, :V].set(fc_b.reshape(1, V))

    return dict(embedding=emb_p, w_gates=w_gates, b_gates=b_gates,
                w_fc=w_fc, b_fc=b_fc, n_layers=L, hidden_dim=H,
                din_pad=din_pad, output_dim=V)


# ----------------------------- reference (pure JAX) ------------------------- #

def decoder_forward_ref(tokens, hidden, cell, params):
    H = params["hidden_dim"]
    L = params["n_layers"]
    Dp = params["din_pad"]
    V = params["output_dim"]
    emb = params["embedding"].astype(jnp.float32)
    x = emb[tokens]                                      # (B, E)
    new_h, new_c = [], []
    for l in range(L):
        w = params["w_gates"][l].astype(jnp.float32)     # (Dp+H, 4H)
        if x.shape[1] < Dp:
            x = jnp.pad(x, ((0, 0), (0, Dp - x.shape[1])))
        xh = jnp.concatenate([x, hidden[l]], axis=1)
        gates = xh @ w + params["b_gates"][l]
        i = jax.nn.sigmoid(gates[:, 0 * H:1 * H])
        f = jax.nn.sigmoid(gates[:, 1 * H:2 * H])
        g = jnp.tanh(gates[:, 2 * H:3 * H])
        o = jax.nn.sigmoid(gates[:, 3 * H:4 * H])
        c_l = f * cell[l] + i * g
        h_l = o * jnp.tanh(c_l)
        new_h.append(h_l)
        new_c.append(c_l)
        x = h_l
    pred = x @ params["w_fc"].astype(jnp.float32)[:, :V] + params["b_fc"][:, :V]
    return pred, jnp.stack(new_h), jnp.stack(new_c)


# ----------------------------- main ------------------------------------------ #

if __name__ == "__main__":
    # Module hyperparameters (small, consistent with Decoder.__init__)
    output_dim, embed_dim, hidden_dim, n_layers = 64, 32, 32, 2
    batch = 8

    key = jax.random.PRNGKey(0)
    keys = jax.random.split(key, 16)

    def wnorm(k, shape, scale=0.1):
        return scale * jax.random.normal(k, shape, dtype=jnp.float32)

    # PyTorch-layout raw weights
    embedding = wnorm(keys[0], (output_dim, embed_dim))          # (V, E)
    fc_w = wnorm(keys[1], (output_dim, hidden_dim))              # (V, H)
    fc_b = wnorm(keys[2], (output_dim,))
    w_ih_list, w_hh_list, b_ih_list, b_hh_list = [], [], [], []
    for l in range(n_layers):
        din = embed_dim if l == 0 else hidden_dim
        w_ih_list.append(wnorm(keys[3 + 4 * l], (4 * hidden_dim, din)))
        w_hh_list.append(wnorm(keys[4 + 4 * l], (4 * hidden_dim, hidden_dim)))
        b_ih_list.append(wnorm(keys[5 + 4 * l], (4 * hidden_dim,)))
        b_hh_list.append(wnorm(keys[6 + 4 * l], (4 * hidden_dim,)))

    params = prepare_params(embedding, w_ih_list, w_hh_list,
                            b_ih_list, b_hh_list, fc_w, fc_b, hidden_dim)

    tokens = jax.random.randint(keys[11], (batch,), 0, output_dim, dtype=jnp.int32)
    hidden0 = 0.1 * jax.random.normal(keys[12], (n_layers, batch, hidden_dim),
                                      dtype=jnp.float32)
    cell0 = 0.1 * jax.random.normal(keys[13], (n_layers, batch, hidden_dim),
                                    dtype=jnp.float32)

    # step 1
    pred, hid, cel = decoder_forward(tokens, hidden0, cell0, params)
    jax.block_until_ready((pred, hid, cel))

    pred_r, hid_r, cel_r = decoder_forward_ref(tokens, hidden0, cell0, params)
    assert pred.shape == (batch, output_dim)
    assert hid.shape == (n_layers, batch, hidden_dim)
    assert cel.shape == (n_layers, batch, hidden_dim)
    assert jnp.allclose(pred, pred_r, atol=1e-2, rtol=1e-2)
    assert jnp.allclose(hid, hid_r, atol=1e-2, rtol=1e-2)
    assert jnp.allclose(cel, cel_r, atol=1e-2, rtol=1e-2)

    # step 2: feed the kernel's state back (autoregressive pattern)
    pred2, hid2, cel2 = decoder_forward(tokens, hid, cel, params)
    jax.block_until_ready((pred2, hid2, cel2))
    pred2_r, hid2_r, cel2_r = decoder_forward_ref(tokens, hid, cel, params)
    assert jnp.allclose(pred2, pred2_r, atol=1e-2, rtol=1e-2)
    assert jnp.allclose(hid2, hid2_r, atol=1e-2, rtol=1e-2)
    assert jnp.allclose(cel2, cel2_r, atol=1e-2, rtol=1e-2)

    print("KERNEL_OK")
</pallas_src>

<mosaic_0001>
module attributes {stable_mosaic.version = 11 : i64} {
  func.func @_decoder_fused_kernel(%arg0: i32, %arg1: memref<8x1xi32, #tpu.memory_space<vmem>>, %arg2: memref<8x128xf32, #tpu.memory_space<vmem>>, %arg3: memref<128x32xbf16, #tpu.memory_space<vmem>>, %arg4: memref<2x64x128xbf16, #tpu.memory_space<vmem>>, %arg5: memref<2x1x128xf32, #tpu.memory_space<vmem>>, %arg6: memref<32x128xbf16, #tpu.memory_space<vmem>>, %arg7: memref<1x128xf32, #tpu.memory_space<vmem>>, %arg8: memref<8x128xf32, #tpu.memory_space<vmem>>, %arg9: memref<8x128xf32, #tpu.memory_space<vmem>>) attributes {dimension_semantics = [#tpu.dimension_semantics<arbitrary>], iteration_bounds = array<i64: 1>, scalar_prefetch = 0 : i64, scratch_operands = 0 : i64, tpu.core_type = #tpu.core_type<tc>, window_params = [{pipeline_mode = #tpu.pipeline_mode<synchronous>, transform_indices = @transform_0, window_bounds = array<i64: 8, 1>}, {pipeline_mode = #tpu.pipeline_mode<synchronous>, transform_indices = @transform_1, window_bounds = array<i64: 8, 128>}, {pipeline_mode = #tpu.pipeline_mode<synchronous>, transform_indices = @transform_2, window_bounds = array<i64: 128, 32>}, {pipeline_mode = #tpu.pipeline_mode<synchronous>, transform_indices = @transform_3, window_bounds = array<i64: 2, 64, 128>}, {pipeline_mode = #tpu.pipeline_mode<synchronous>, transform_indices = @transform_4, window_bounds = array<i64: 2, 1, 128>}, {pipeline_mode = #tpu.pipeline_mode<synchronous>, transform_indices = @transform_5, window_bounds = array<i64: 32, 128>}, {pipeline_mode = #tpu.pipeline_mode<synchronous>, transform_indices = @transform_6, window_bounds = array<i64: 1, 128>}, {pipeline_mode = #tpu.pipeline_mode<synchronous>, transform_indices = @transform_7, window_bounds = array<i64: 8, 128>}, {pipeline_mode = #tpu.pipeline_mode<synchronous>, transform_indices = @transform_8, window_bounds = array<i64: 8, 128>}]} {
    %c0 = arith.constant 0 : index
    %c0_0 = arith.constant 0 : index
    %0 = vector.load %arg1[%c0, %c0_0] : memref<8x1xi32, #tpu.memory_space<vmem>>, vector<8x1xi32>
    %1 = tpu.iota {dimensions = array<i32: 1>} : vector<8x128xi32>
    %2 = vector.broadcast %0 : vector<8x1xi32> to vector<8x128xi32>
    %3 = arith.cmpi eq, %1, %2 : vector<8x128xi32>
    %4 = arith.extui %3 : vector<8x128xi1> to vector<8x128xi32>
    %5 = arith.sitofp %4 : vector<8x128xi32> to vector<8x128xf32>
    %6 = arith.truncf %5 : vector<8x128xf32> to vector<8x128xbf16>
    %c0_1 = arith.constant 0 : index
    %c0_2 = arith.constant 0 : index
    %7 = vector.load %arg3[%c0_1, %c0_2] : memref<128x32xbf16, #tpu.memory_space<vmem>>, vector<128x32xbf16>
    %cst = arith.constant dense<0.000000e+00> : vector<8x32xf32>
    %8 = tpu.matmul %6, %7, %cst {dimension_numbers = #tpu.dot_dimension_numbers<[1], [0], [0], [1], [0, 0, 1, 1], [], []>} : vector<8x128xbf16>, vector<128x32xbf16>, vector<8x32xf32> -> vector<8x32xf32>
    %c0_3 = arith.constant 0 : index
    %c0_4 = arith.constant 0 : index
    %9 = vector.load %arg2[%c0_3, %c0_4] : memref<8x128xf32, #tpu.memory_space<vmem>>, vector<8x128xf32>
    %c0_5 = arith.constant 0 : index
    %c0_6 = arith.constant 0 : index
    %c0_7 = arith.constant 0 : index
    %10 = vector.load %arg4[%c0_5, %c0_6, %c0_7] : memref<2x64x128xbf16, #tpu.memory_space<vmem>>, vector<1x64x128xbf16>
    %11 = vector.shape_cast %10 : vector<1x64x128xbf16> to vector<64x128xbf16>
    %c0_8 = arith.constant 0 : index
    %c0_9 = arith.constant 0 : index
    %c0_10 = arith.constant 0 : index
    %12 = vector.load %arg5[%c0_8, %c0_9, %c0_10] : memref<2x1x128xf32, #tpu.memory_space<vmem>>, vector<1x1x128xf32>
    %13 = vector.shape_cast %12 : vector<1x1x128xf32> to vector<1x128xf32>
    %14 = vector.extract_strided_slice %9 {offsets = [0, 0], sizes = [8, 32], strides = [1, 1]} : vector<8x128xf32> to vector<8x32xf32>
    %15 = vector.extract_strided_slice %9 {offsets = [0, 32], sizes = [8, 32], strides = [1, 1]} : vector<8x128xf32> to vector<8x32xf32>
    %16 = tpu.concatenate %8, %14 in 1 : vector<8x32xf32>, vector<8x32xf32> -> vector<8x64xf32>
    %17 = arith.truncf %16 : vector<8x64xf32> to vector<8x64xbf16>
    %cst_11 = arith.constant dense<0.000000e+00> : vector<8x128xf32>
    %18 = tpu.matmul %17, %11, %cst_11 {dimension_numbers = #tpu.dot_dimension_numbers<[1], [0], [0], [1], [0, 0, 1, 1], [], []>} : vector<8x64xbf16>, vector<64x128xbf16>, vector<8x128xf32> -> vector<8x128xf32>
    %19 = vector.broadcast %13 : vector<1x128xf32> to vector<8x128xf32>
    %20 = arith.addf %18, %19 : vector<8x128xf32>
    %21 = arith.negf %20 : vector<8x128xf32>
    %22 = math.exp %21 : vector<8x128xf32>
    %cst_12 = arith.constant 1.000000e+00 : f32
    %23 = vector.broadcast %cst_12 : f32 to vector<8x128xf32>
    %24 = arith.addf %23, %22 : vector<8x128xf32>
    %25 = arith.divf %23, %24 : vector<8x128xf32>
    %26 = vector.extract_strided_slice %20 {offsets = [0, 64], sizes = [8, 32], strides = [1, 1]} : vector<8x128xf32> to vector<8x32xf32>
    %27 = math.tanh %26 : vector<8x32xf32>
    %28 = vector.extract_strided_slice %25 {offsets = [0, 0], sizes = [8, 32], strides = [1, 1]} : vector<8x128xf32> to vector<8x32xf32>
    %29 = vector.extract_strided_slice %25 {offsets = [0, 32], sizes = [8, 32], strides = [1, 1]} : vector<8x128xf32> to vector<8x32xf32>
    %30 = vector.extract_strided_slice %25 {offsets = [0, 96], sizes = [8, 32], strides = [1, 1]} : vector<8x128xf32> to vector<8x32xf32>
    %31 = arith.mulf %29, %15 : vector<8x32xf32>
    %32 = arith.mulf %28, %27 : vector<8x32xf32>
    %33 = arith.addf %31, %32 : vector<8x32xf32>
    %34 = math.tanh %33 : vector<8x32xf32>
    %35 = arith.mulf %30, %34 : vector<8x32xf32>
    %c1 = arith.constant 1 : index
    %c0_13 = arith.constant 0 : index
    %c0_14 = arith.constant 0 : index
    %36 = vector.load %arg4[%c1, %c0_13, %c0_14] : memref<2x64x128xbf16, #tpu.memory_space<vmem>>, vector<1x64x128xbf16>
    %37 = vector.shape_cast %36 : vector<1x64x128xbf16> to vector<64x128xbf16>
    %c1_15 = arith.constant 1 : index
    %c0_16 = arith.constant 0 : index
    %c0_17 = arith.constant 0 : index
    %38 = vector.load %arg5[%c1_15, %c0_16, %c0_17] : memref<2x1x128xf32, #tpu.memory_space<vmem>>, vector<1x1x128xf32>
    %39 = vector.shape_cast %38 : vector<1x1x128xf32> to vector<1x128xf32>
    %40 = vector.extract_strided_slice %9 {offsets = [0, 64], sizes = [8, 32], strides = [1, 1]} : vector<8x128xf32> to vector<8x32xf32>
    %41 = vector.extract_strided_slice %9 {offsets = [0, 96], sizes = [8, 32], strides = [1, 1]} : vector<8x128xf32> to vector<8x32xf32>
    %42 = tpu.concatenate %35, %40 in 1 : vector<8x32xf32>, vector<8x32xf32> -> vector<8x64xf32>
    %43 = arith.truncf %42 : vector<8x64xf32> to vector<8x64xbf16>
    %cst_18 = arith.constant dense<0.000000e+00> : vector<8x128xf32>
    %44 = tpu.matmul %43, %37, %cst_18 {dimension_numbers = #tpu.dot_dimension_numbers<[1], [0], [0], [1], [0, 0, 1, 1], [], []>} : vector<8x64xbf16>, vector<64x128xbf16>, vector<8x128xf32> -> vector<8x128xf32>
    %45 = vector.broadcast %39 : vector<1x128xf32> to vector<8x128xf32>
    %46 = arith.addf %44, %45 : vector<8x128xf32>
    %47 = arith.negf %46 : vector<8x128xf32>
    %48 = math.exp %47 : vector<8x128xf32>
    %cst_19 = arith.constant 1.000000e+00 : f32
    %49 = vector.broadcast %cst_19 : f32 to vector<8x128xf32>
    %50 = arith.addf %49, %48 : vector<8x128xf32>
    %51 = arith.divf %49, %50 : vector<8x128xf32>
    %52 = vector.extract_strided_slice %46 {offsets = [0, 64], sizes = [8, 32], strides = [1, 1]} : vector<8x128xf32> to vector<8x32xf32>
    %53 = math.tanh %52 : vector<8x32xf32>
    %54 = vector.extract_strided_slice %51 {offsets = [0, 0], sizes = [8, 32], strides = [1, 1]} : vector<8x128xf32> to vector<8x32xf32>
    %55 = vector.extract_strided_slice %51 {offsets = [0, 32], sizes = [8, 32], strides = [1, 1]} : vector<8x128xf32> to vector<8x32xf32>
    %56 = vector.extract_strided_slice %51 {offsets = [0, 96], sizes = [8, 32], strides = [1, 1]} : vector<8x128xf32> to vector<8x32xf32>
    %57 = arith.mulf %55, %41 : vector<8x32xf32>
    %58 = arith.mulf %54, %53 : vector<8x32xf32>
    %59 = arith.addf %57, %58 : vector<8x32xf32>
    %60 = math.tanh %59 : vector<8x32xf32>
    %61 = arith.mulf %56, %60 : vector<8x32xf32>
    %62 = tpu.concatenate %35, %33, %61, %59 in 1 : vector<8x32xf32>, vector<8x32xf32>, vector<8x32xf32>, vector<8x32xf32> -> vector<8x128xf32>
    %c0_20 = arith.constant 0 : index
    %c0_21 = arith.constant 0 : index
    %63 = vector.load %arg9[%c0_20, %c0_21] : memref<8x128xf32, #tpu.memory_space<vmem>>, vector<8x128xf32>
    tpu.vector_store %arg9[%c0_20, %c0_21], %62 {strides = array<i32>} : memref<8x128xf32, #tpu.memory_space<vmem>>, vector<8x128xf32>,
    %64 = arith.truncf %61 : vector<8x32xf32> to vector<8x32xbf16>
    %c0_22 = arith.constant 0 : index
    %c0_23 = arith.constant 0 : index
    %65 = vector.load %arg6[%c0_22, %c0_23] : memref<32x128xbf16, #tpu.memory_space<vmem>>, vector<32x128xbf16>
    %cst_24 = arith.constant dense<0.000000e+00> : vector<8x128xf32>
    %66 = tpu.matmul %64, %65, %cst_24 {dimension_numbers = #tpu.dot_dimension_numbers<[1], [0], [0], [1], [0, 0, 1, 1], [], []>} : vector<8x32xbf16>, vector<32x128xbf16>, vector<8x128xf32> -> vector<8x128xf32>
    %c0_25 = arith.constant 0 : index
    %c0_26 = arith.constant 0 : index
    %67 = vector.load %arg7[%c0_25, %c0_26] : memref<1x128xf32, #tpu.memory_space<vmem>>, vector<1x128xf32>
    %68 = vector.broadcast %67 : vector<1x128xf32> to vector<8x128xf32>
    %69 = arith.addf %66, %68 : vector<8x128xf32>
    %c0_27 = arith.constant 0 : index
    %c0_28 = arith.constant 0 : index
    %70 = vector.load %arg8[%c0_27, %c0_28] : memref<8x128xf32, #tpu.memory_space<vmem>>, vector<8x128xf32>
    tpu.vector_store %arg8[%c0_27, %c0_28], %69 {strides = array<i32>} : memref<8x128xf32, #tpu.memory_space<vmem>>, vector<8x128xf32>,
    return
  }
  func.func @transform_0(%arg0: i32) -> (i32, i32) {
    %c0_i32 = arith.constant 0 : i32
    %c0_i32_0 = arith.constant 0 : i32
    %c0_i32_1 = arith.constant 0 : i32
    return %c0_i32, %c0_i32_0 : i32, i32
  }
  func.func @transform_1(%arg0: i32) -> (i32, i32) {
    %c0_i32 = arith.constant 0 : i32
    %c0_i32_0 = arith.constant 0 : i32
    %c0_i32_1 = arith.constant 0 : i32
    return %c0_i32, %c0_i32_0 : i32, i32
  }
  func.func @transform_2(%arg0: i32) -> (i32, i32) {
    %c0_i32 = arith.constant 0 : i32
    %c0_i32_0 = arith.constant 0 : i32
    %c0_i32_1 = arith.constant 0 : i32
    return %c0_i32, %c0_i32_0 : i32, i32
  }
  func.func @transform_3(%arg0: i32) -> (i32, i32, i32) {
    %c0_i32 = arith.constant 0 : i32
    %c0_i32_0 = arith.constant 0 : i32
    %c0_i32_1 = arith.constant 0 : i32
    %c0_i32_2 = arith.constant 0 : i32
    return %c0_i32, %c0_i32_0, %c0_i32_1 : i32, i32, i32
  }
  func.func @transform_4(%arg0: i32) -> (i32, i32, i32) {
    %c0_i32 = arith.constant 0 : i32
    %c0_i32_0 = arith.constant 0 : i32
    %c0_i32_1 = arith.constant 0 : i32
    %c0_i32_2 = arith.constant 0 : i32
    return %c0_i32, %c0_i32_0, %c0_i32_1 : i32, i32, i32
  }
  func.func @transform_5(%arg0: i32) -> (i32, i32) {
    %c0_i32 = arith.constant 0 : i32
    %c0_i32_0 = arith.constant 0 : i32
    %c0_i32_1 = arith.constant 0 : i32
    return %c0_i32, %c0_i32_0 : i32, i32
  }
  func.func @transform_6(%arg0: i32) -> (i32, i32) {
    %c0_i32 = arith.constant 0 : i32
    %c0_i32_0 = arith.constant 0 : i32
    %c0_i32_1 = arith.constant 0 : i32
    return %c0_i32, %c0_i32_0 : i32, i32
  }
  func.func @transform_7(%arg0: i32) -> (i32, i32) {
    %c0_i32 = arith.constant 0 : i32
    %c0_i32_0 = arith.constant 0 : i32
    %c0_i32_1 = arith.constant 0 : i32
    return %c0_i32, %c0_i32_0 : i32, i32
  }
  func.func @transform_8(%arg0: i32) -> (i32, i32) {
    %c0_i32 = arith.constant 0 : i32
    %c0_i32_0 = arith.constant 0 : i32
    %c0_i32_1 = arith.constant 0 : i32
    return %c0_i32, %c0_i32_0 : i32, i32
  }
}

</mosaic_0001>

<llo_original>
// kernel: tpu_custom_call.1
$region0: #{tpu_custom_call.1}
  #allocation0 [shape = 'u32[]', space=smem, size = 0x4, offset = 0x4, fixed_abs, tag = 'smem constant byte address 0x4 - core index']
  #allocation1 [shape = 'u32[144,128]{1,0:T(1,128)}', space=vmem, size = 0x12000, scoped, tag = 'internal scratch']
  %s0 = inlined_call_operand.vmem [shape: s32[8,1], index: 0, kind: input, shape index: {}]
  %s1 = inlined_call_operand.hbm [shape: f32[8,128], index: 1, kind: input, shape index: {}, may-alias: {1,8}]
  %s2 = inlined_call_operand.vmem [shape: bf16[128,32], index: 2, kind: input, shape index: {}]
  %s3 = inlined_call_operand.vmem [shape: bf16[2,64,128], index: 3, kind: input, shape index: {}]
  %s4 = inlined_call_operand.vmem [shape: f32[2,1,128], index: 4, kind: input, shape index: {}]
  %s5 = inlined_call_operand.vmem [shape: bf16[32,128], index: 5, kind: input, shape index: {}]
  %s6 = inlined_call_operand.vmem [shape: f32[1,128], index: 6, kind: input, shape index: {}]
  %s7 = inlined_call_operand.hbm [shape: f32[8,128], index: 7, kind: output, shape index: {0}]
  %s8 = inlined_call_operand.hbm [shape: f32[8,128], index: 8, kind: output, shape index: {1}, may-alias: {1,8}]
  %9 = xla_tuple %s7, %s8
  %s10 = sld [smem:[#allocation0]]
  $region50: #{tpu_custom_call.1} parent=0
    _
  %s12 = ssub.s32 1, %s10
  %s13 = scalar_select 0, %s12, %s10
  $region1: #{tpu_custom_call.1} parent=0
    #allocation2 [shape = 'u8[4096]{0}', space=vmem, size = 0x1000, scoped, tag = 'input window, operand 1, single buffered']
    #allocation3 [shape = 's32[1]{0}', space=sflag, size = 0x4, scoped, tag = 'scoped memory for tpu_custom_call.1']
    #allocation4 [shape = 's32[1]{0}', space=sflag, size = 0x4, scoped, tag = 'scoped memory for tpu_custom_call.1']
    #allocation5 [shape = 'u8[4096]{0}', space=vmem, size = 0x1000, scoped, tag = 'output window, operand 0, single buffered']
    #allocation6 [shape = 'u8[4096]{0}', space=vmem, size = 0x1000, scoped, tag = 'output window, operand 1, single buffered']
    #allocation7 [shape = 's32[1]{0}', space=sflag, size = 0x4, scoped, tag = 'scoped memory for tpu_custom_call.1']
    %14 = vsyncpa [#allocation3], 0
    %15 = vsyncpa [#allocation4], 0
    %16 = vsyncpa [#allocation7], 0
    // Predicated region
    $region2: #{tpu_custom_call.1} parent=1 // pred_check
      _
    $region3: #{tpu_custom_call.1} parent=1 // pred_check_branch
      %18 = sbr.rel (0) target = $region5
    $region4: #{tpu_custom_call.1} parent=1 // pred_region
      _
    $region5: #{tpu_custom_call.1} parent=1 // pred_fallthru
      _
    // Predicated region
    $region6: #{tpu_custom_call.1} parent=1 // pred_check
      _
    $region7: #{tpu_custom_call.1} parent=1 // pred_check_branch
      %20 = sbr.rel (0) target = $region9
    $region8: #{tpu_custom_call.1} parent=1 // pred_region
      %s22 = ssub.s32 128, 128
      %23 = vsyncadd [#allocation3], %s22
      %s25 = sshll.u32 [#allocation2], 4
      %s26 = int_to_ptr.vmem [resolvable:$true] %s25
      %28 = dma.hbm_to_vmem [thread:$0]  %s1, 128, %s26, [#allocation3]
    $region9: #{tpu_custom_call.1} parent=1 // pred_fallthru
      _
    // Predicated region
    $region10: #{tpu_custom_call.1} parent=1 // pred_check
      _
    $region11: #{tpu_custom_call.1} parent=1 // pred_check_branch
      %30 = sbr.rel (0) target = $region13
    $region12: #{tpu_custom_call.1} parent=1 // pred_region
      _
    $region13: #{tpu_custom_call.1} parent=1 // pred_fallthru
      _
    // Predicated region
    $region14: #{tpu_custom_call.1} parent=1 // pred_check
      _
    $region15: #{tpu_custom_call.1} parent=1 // pred_check_branch
      %32 = sbr.rel (0) target = $region17
    $region16: #{tpu_custom_call.1} parent=1 // pred_region
      _
    $region17: #{tpu_custom_call.1} parent=1 // pred_fallthru
      _
    // Predicated region
    $region18: #{tpu_custom_call.1} parent=1 // pred_check
      _
    $region19: #{tpu_custom_call.1} parent=1 // pred_check_branch
      %34 = sbr.rel (0) target = $region21
    $region20: #{tpu_custom_call.1} parent=1 // pred_region
      _
    $region21: #{tpu_custom_call.1} parent=1 // pred_fallthru
      _
    // Predicated region
    $region22: #{tpu_custom_call.1} parent=1 // pred_check
      _
    $region23: #{tpu_custom_call.1} parent=1 // pred_check_branch
      %36 = sbr.rel (0) target = $region25
    $region24: #{tpu_custom_call.1} parent=1 // pred_region
      _
    $region25: #{tpu_custom_call.1} parent=1 // pred_fallthru
      _
    // Predicated region
    $region26: #{tpu_custom_call.1} parent=1 // pred_check
      _
    $region27: #{tpu_custom_call.1} parent=1 // pred_check_branch
      %38 = sbr.rel (0) target = $region29
    $region28: #{tpu_custom_call.1} parent=1 // pred_region
      _
    $region29: #{tpu_custom_call.1} parent=1 // pred_fallthru
      _
    // Predicated region
    $region30: #{tpu_custom_call.1} parent=1 // pred_check
      _
    $region31: #{tpu_custom_call.1} parent=1 // pred_check_branch
      %40 = sbr.rel (0) target = $region33
    $region32: #{tpu_custom_call.1} parent=1 // pred_region
      %41 = dma.done [#allocation3], 128
    $region33: #{tpu_custom_call.1} parent=1 // pred_fallthru
      _
    %v43 = vld [vmem:[%s0] sm:$0xff]
    %v44 = vlaneseq
    %v45 = vand.u32 %v44, 127
    %46 = vset.pattern.permute.xlu0 0
    %47 = vperm.xlu0 %46, %v43
    %v48 = vpop.permute.xlu0 %47
    %vm49 = vcmp.eq.s32.totalorder %v45, %v48
    %v50 = vsel %vm49, 1, 0
    %v51 = vcvt.s32.f32 %v50
    %v52 = vpack.c.bf16 %v51, %v51
    %v53 = vld [vmem:[%s2] sm:$0xf]
    %v54 = vld [vmem:[%s2 + $0x4] sm:$0xf]
    %v55 = vld [vmem:[%s2 + $0x8] sm:$0xf]
    %v56 = vld [vmem:[%s2 + $0xc] sm:$0xf]
    %v57 = vld [vmem:[%s2 + $0x10] sm:$0xf]
    %v58 = vld [vmem:[%s2 + $0x14] sm:$0xf]
    %v59 = vld [vmem:[%s2 + $0x18] sm:$0xf]
    %v60 = vld [vmem:[%s2 + $0x1c] sm:$0xf]
    %v61 = vld [vmem:[%s2 + $0x20] sm:$0xf]
    %v62 = vld [vmem:[%s2 + $0x24] sm:$0xf]
    %v63 = vld [vmem:[%s2 + $0x28] sm:$0xf]
    %v64 = vld [vmem:[%s2 + $0x2c] sm:$0xf]
    %v65 = vld [vmem:[%s2 + $0x30] sm:$0xf]
    %v66 = vld [vmem:[%s2 + $0x34] sm:$0xf]
    %v67 = vld [vmem:[%s2 + $0x38] sm:$0xf]
    %v68 = vld [vmem:[%s2 + $0x3c] sm:$0xf]
    %v85 = vunpack.c.l.b16 %v53
    %v86 = vunpack.c.l.b16 %v54
    %v87 = vunpack.c.l.b16 %v55
    %v88 = vunpack.c.l.b16 %v56
    %v89 = vunpack.c.l.b16 %v57
    %v90 = vunpack.c.l.b16 %v58
    %v91 = vunpack.c.l.b16 %v59
    %v92 = vunpack.c.l.b16 %v60
    %v93 = vunpack.c.l.b16 %v61
    %v94 = vunpack.c.l.b16 %v62
    %v95 = vunpack.c.l.b16 %v63
    %v96 = vunpack.c.l.b16 %v64
    %v97 = vunpack.c.l.b16 %v65
    %v98 = vunpack.c.l.b16 %v66
    %v99 = vunpack.c.l.b16 %v67
    %v100 = vunpack.c.l.b16 %v68
    %v101 = vpack.c.b16 %v86, %v85
    %v102 = vpack.c.b16 %v88, %v87
    %v103 = vpack.c.b16 %v90, %v89
    %v104 = vpack.c.b16 %v92, %v91
    %v105 = vpack.c.b16 %v94, %v93
    %v106 = vpack.c.b16 %v96, %v95
    %v107 = vpack.c.b16 %v98, %v97
    %v108 = vpack.c.b16 %v100, %v99
    %117 = vmatprep.subr.bf16.mxu0 0
    %118 = vmatpush1.bf16.msra.mxu0 %v101
    %119 = vmatprep.subr.bf16.mxu0 0
    %120 = vmatpush1.bf16.msra.mxu0 %v102
    %121 = vmatprep.subr.bf16.mxu0 0
    %122 = vmatpush1.bf16.msra.mxu0 %v103
    %123 = vmatprep.subr.bf16.mxu0 0
    %124 = vmatpush1.bf16.msra.mxu0 %v104
    %125 = vmatprep.subr.bf16.mxu0 0
    %126 = vmatpush1.bf16.msra.mxu0 %v105
    %127 = vmatprep.subr.bf16.mxu0 0
    %128 = vmatpush1.bf16.msra.mxu0 %v106
    %129 = vmatprep.subr.bf16.mxu0 0
    %130 = vmatpush1.bf16.msra.mxu0 %v107
    %131 = vmatprep.subr.bf16.mxu0 0
    %132 = vmatpush1.bf16.msra.mxu0 %v108
    %133 = vmatprep.subr.bf16.mxu0 0
    %134 = vmatpush1.bf16.msra.mxu0 0
    %135 = vmatprep.subr.bf16.mxu0 0
    %136 = vmatpush1.bf16.msra.mxu0 0
    %137 = vmatprep.subr.bf16.mxu0 0
    %138 = vmatpush1.bf16.msra.mxu0 0
    %139 = vmatprep.subr.bf16.mxu0 0
    %140 = vmatpush1.bf16.msra.mxu0 0
    %141 = vmatprep.subr.bf16.mxu0 0
    %142 = vmatpush1.bf16.msra.mxu0 0
    %143 = vmatprep.subr.bf16.mxu0 0
    %144 = vmatpush1.bf16.msra.mxu0 0
    %145 = vmatprep.subr.bf16.mxu0 0
    %146 = vmatpush1.bf16.msra.mxu0 0
    %147 = vmatprep.subr.bf16.mxu0 0
    %148 = vmatpush1.bf16.msra.mxu0 0
    %149 = vmatprep.mubr.bf16.mxu0 0
    %150 = vmatmul.mubr.bf16.gmra.mrb[0].mxu0 %v52
    %v151 = vpop.f32.mrb[0].mxu0
    %v152 = vadd.f32 0.0, %v151
    %v153 = vpop.f32.mrb[0].mxu0
    %v154 = vpop.f32.mrb[0].mxu0
    %v155 = vpop.f32.mrb[0].mxu0
    %156 = vdwg.mxu0
    %v157 = vld [vmem:[#allocation2] sm:$0xff]
    %v158 = vld [vmem:[%s3] sm:$0xf]
    %v159 = vld [vmem:[%s3 + $0x4] sm:$0xf]
    %v160 = vld [vmem:[%s3 + $0x8] sm:$0xf]
    %v161 = vld [vmem:[%s3 + $0xc] sm:$0xf]
    %v162 = vld [vmem:[%s3 + $0x10] sm:$0xf]
    %v163 = vld [vmem:[%s3 + $0x14] sm:$0xf]
    %v164 = vld [vmem:[%s3 + $0x18] sm:$0xf]
    %v165 = vld [vmem:[%s3 + $0x1c] sm:$0xf]
    %v166 = vld [vmem:[%s4] sm:$0x1]
    %168 = vrot.lane.b32.xlu0 %v157, 32
    %v169 = vpop.permute.xlu0 %168
    %vm171 = vcmask 261120
    %v172 = vsel %vm171, %v152, %v169
    %v173 = vpack.c.bf16 %v172, %v172
    %v175 = vlaneseq
    %v176 = vshrl.u32 %v175, 7
    %v177 = vsub.s32 0, %v176
    %v178 = vrot.slane %v166, %v177
    %v188 = vunpack.c.l.b16 %v158
    %v189 = vunpack.c.l.b16 %v159
    %v190 = vunpack.c.l.b16 %v160
    %v191 = vunpack.c.l.b16 %v161
    %v192 = vunpack.c.l.b16 %v162
    %v193 = vunpack.c.l.b16 %v163
    %v194 = vunpack.c.l.b16 %v164
    %v195 = vunpack.c.l.b16 %v165
    %v196 = vpack.c.b16 %v189, %v188
    %v197 = vpack.c.b16 %v191, %v190
    %v198 = vpack.c.b16 %v193, %v192
    %v199 = vpack.c.b16 %v195, %v194
    %vm204 = vcmask 523264
    %v206 = vsel %vm204, %v173, 0
    %208 = vmatprep.subr.bf16.mxu0 0
    %209 = vmatpush1.bf16.msra.mxu0 %v196
    %210 = vmatprep.subr.bf16.mxu0 0
    %211 = vmatpush1.bf16.msra.mxu0 %v197
    %212 = vmatprep.subr.bf16.mxu0 0
    %213 = vmatpush1.bf16.msra.mxu0 %v198
    %214 = vmatprep.subr.bf16.mxu0 0
    %215 = vmatpush1.bf16.msra.mxu0 %v199
    %216 = vmatprep.subr.bf16.mxu0 0
    %217 = vmatpush1.bf16.msra.mxu0 0
    %218 = vmatprep.subr.bf16.mxu0 0
    %219 = vmatpush1.bf16.msra.mxu0 0
    %220 = vmatprep.subr.bf16.mxu0 0
    %221 = vmatpush1.bf16.msra.mxu0 0
    %222 = vmatprep.subr.bf16.mxu0 0
    %223 = vmatpush1.bf16.msra.mxu0 0
    %224 = vmatprep.subr.bf16.mxu0 0
    %225 = vmatpush1.bf16.msra.mxu0 0
    %226 = vmatprep.subr.bf16.mxu0 0
    %227 = vmatpush1.bf16.msra.mxu0 0
    %228 = vmatprep.subr.bf16.mxu0 0
    %229 = vmatpush1.bf16.msra.mxu0 0
    %230 = vmatprep.subr.bf16.mxu0 0
    %231 = vmatpush1.bf16.msra.mxu0 0
    %232 = vmatprep.subr.bf16.mxu0 0
    %233 = vmatpush1.bf16.msra.mxu0 0
    %234 = vmatprep.subr.bf16.mxu0 0
    %235 = vmatpush1.bf16.msra.mxu0 0
    %236 = vmatprep.subr.bf16.mxu0 0
    %237 = vmatpush1.bf16.msra.mxu0 0
    %238 = vmatprep.subr.bf16.mxu0 0
    %239 = vmatpush1.bf16.msra.mxu0 0
    %240 = vmatprep.mubr.bf16.mxu0 0
    %241 = vmatmul.mubr.bf16.gmra.mrb[0].mxu0 %v206
    %v242 = vpop.f32.mrb[0].mxu0
    %v243 = vadd.f32 %v178, %v242
    %v244 = vpop.f32.mrb[0].mxu0
    %v245 = vpop.f32.mrb[0].mxu0
    %v246 = vpop.f32.mrb[0].mxu0
    %247 = vdwg.mxu0
    %v248 = vxor.u32 %v243, 2147483648
    %v249 = vmul.f32 %v248, 1.442695
    %v250 = vpow.pop %v249
    %v251 = vadd.f32 %v250, 1.0
    %v252 = vrcp.pop %v251
    %v253 = vmul.f32 1.0, %v252
    %v254 = vtanh.pop %v243
    %v255 = vmul.f32 %v253, %v157
    %257 = vrot.lane.b32.xlu0 %v254, 64
    %v258 = vpop.permute.xlu0 %257
    %v260 = vmul.f32 %v253, %v258
    %262 = vrot.lane.b32.xlu0 %v260, 32
    %v263 = vpop.permute.xlu0 %262
    %v265 = vadd.f32 %v255, %v263
    %v266 = vtanh.pop %v265
    %268 = vrot.lane.b32.xlu0 %v266, 64
    %v269 = vpop.permute.xlu0 %268
    %v271 = vmul.f32 %v253, %v269
    %s272 = scalar_lea.vmem %s3, 32
    %v273 = vld [vmem:[%s272] sm:$0xf]
    %v274 = vld [vmem:[%s272 + $0x4] sm:$0xf]
    %v275 = vld [vmem:[%s272 + $0x8] sm:$0xf]
    %v276 = vld [vmem:[%s272 + $0xc] sm:$0xf]
    %v277 = vld [vmem:[%s272 + $0x10] sm:$0xf]
    %v278 = vld [vmem:[%s272 + $0x14] sm:$0xf]
    %v279 = vld [vmem:[%s272 + $0x18] sm:$0xf]
    %v280 = vld [vmem:[%s272 + $0x1c] sm:$0xf]
    %s281 = scalar_lea.vmem %s4, 1
    %v282 = vld [vmem:[%s281] sm:$0x1]
    %284 = vrot.lane.b32.xlu0 %v271, 32
    %v285 = vpop.permute.xlu0 %284
    %287 = vrot.lane.b32.xlu0 %v157, 96
    %v288 = vpop.permute.xlu0 %287
    %v290 = vsel %vm171, %v285, %v288
    %v291 = vpack.c.bf16 %v290, %v290
    %v293 = vlaneseq
    %v294 = vshrl.u32 %v293, 7
    %v295 = vsub.s32 0, %v294
    %v296 = vrot.slane %v282, %v295
    %v306 = vunpack.c.l.b16 %v273
    %v307 = vunpack.c.l.b16 %v274
    %v308 = vunpack.c.l.b16 %v275
    %v309 = vunpack.c.l.b16 %v276
    %v310 = vunpack.c.l.b16 %v277
    %v311 = vunpack.c.l.b16 %v278
    %v312 = vunpack.c.l.b16 %v279
    %v313 = vunpack.c.l.b16 %v280
    %v314 = vpack.c.b16 %v307, %v306
    %v315 = vpack.c.b16 %v309, %v308
    %v316 = vpack.c.b16 %v311, %v310
    %v317 = vpack.c.b16 %v313, %v312
    %v323 = vsel %vm204, %v291, 0
    %325 = vmatprep.subr.bf16.mxu0 0
    %326 = vmatpush1.bf16.msra.mxu0 %v314
    %327 = vmatprep.subr.bf16.mxu0 0
    %328 = vmatpush1.bf16.msra.mxu0 %v315
    %329 = vmatprep.subr.bf16.mxu0 0
    %330 = vmatpush1.bf16.msra.mxu0 %v316
    %331 = vmatprep.subr.bf16.mxu0 0
    %332 = vmatpush1.bf16.msra.mxu0 %v317
    %333 = vmatprep.subr.bf16.mxu0 0
    %334 = vmatpush1.bf16.msra.mxu0 0
    %335 = vmatprep.subr.bf16.mxu0 0
    %336 = vmatpush1.bf16.msra.mxu0 0
    %337 = vmatprep.subr.bf16.mxu0 0
    %338 = vmatpush1.bf16.msra.mxu0 0
    %339 = vmatprep.subr.bf16.mxu0 0
    %340 = vmatpush1.bf16.msra.mxu0 0
    %341 = vmatprep.subr.bf16.mxu0 0
    %342 = vmatpush1.bf16.msra.mxu0 0
    %343 = vmatprep.subr.bf16.mxu0 0
    %344 = vmatpush1.bf16.msra.mxu0 0
    %345 = vmatprep.subr.bf16.mxu0 0
    %346 = vmatpush1.bf16.msra.mxu0 0
    %347 = vmatprep.subr.bf16.mxu0 0
    %348 = vmatpush1.bf16.msra.mxu0 0
    %349 = vmatprep.subr.bf16.mxu0 0
    %350 = vmatpush1.bf16.msra.mxu0 0
    %351 = vmatprep.subr.bf16.mxu0 0
    %352 = vmatpush1.bf16.msra.mxu0 0
    %353 = vmatprep.subr.bf16.mxu0 0
    %354 = vmatpush1.bf16.msra.mxu0 0
    %355 = vmatprep.subr.bf16.mxu0 0
    %356 = vmatpush1.bf16.msra.mxu0 0
    %357 = vmatprep.mubr.bf16.mxu0 0
    %358 = vmatmul.mubr.bf16.gmra.mrb[0].mxu0 %v323
    %v359 = vpop.f32.mrb[0].mxu0
    %v360 = vadd.f32 %v296, %v359
    %v361 = vpop.f32.mrb[0].mxu0
    %v362 = vpop.f32.mrb[0].mxu0
    %v363 = vpop.f32.mrb[0].mxu0
    %364 = vdwg.mxu0
    %v365 = vxor.u32 %v360, 2147483648
    %v366 = vmul.f32 %v365, 1.442695
    %v367 = vpow.pop %v366
    %v368 = vadd.f32 %v367, 1.0
    %v369 = vrcp.pop %v368
    %v370 = vmul.f32 1.0, %v369
    %v371 = vtanh.pop %v360
    %372 = vrot.lane.b32.xlu0 %v157, 64
    %v373 = vpop.permute.xlu0 %372
    %v375 = vmul.f32 %v370, %v373
    %377 = vrot.lane.b32.xlu0 %v371, 64
    %v378 = vpop.permute.xlu0 %377
    %v380 = vmul.f32 %v370, %v378
    %382 = vrot.lane.b32.xlu0 %v380, 32
    %v383 = vpop.permute.xlu0 %382
    %v385 = vadd.f32 %v375, %v383
    %v386 = vtanh.pop %v385
    %388 = vrot.lane.b32.xlu0 %v386, 64
    %v389 = vpop.permute.xlu0 %388
    %v391 = vmul.f32 %v370, %v389
    %393 = vrot.lane.b32.xlu0 %v391, 96
    %v394 = vpop.permute.xlu0 %393
    %397 = vrot.lane.b32.xlu0 %v385, 64
    %v398 = vpop.permute.xlu0 %397
    %v400 = vsel %vm171, %v285, %v265
    %v401 = vsel %vm204, %v400, %v394
    %vm402 = vcmask 785408
    %v403 = vsel %vm402, %v401, %v398
    %404 = vst [vmem:[#allocation6] sm:$0xff] %v403
    %v405 = vpack.c.bf16 %v391, %v391
    %v406 = vld [vmem:[%s5] sm:$0xf]
    %v407 = vld [vmem:[%s5 + $0x4] sm:$0xf]
    %v408 = vld [vmem:[%s5 + $0x8] sm:$0xf]
    %v409 = vld [vmem:[%s5 + $0xc] sm:$0xf]
    %v410 = vld [vmem:[%s6] sm:$0x1]
    %v412 = vlaneseq
    %v413 = vshrl.u32 %v412, 7
    %v414 = vsub.s32 0, %v413
    %v415 = vrot.slane %v410, %v414
    %418 = vrot.lane.b32.xlu0 %v405, 32
    %v419 = vpop.permute.xlu0 %418
    %v424 = vunpack.c.l.b16 %v406
    %v425 = vunpack.c.l.b16 %v407
    %v426 = vunpack.c.l.b16 %v408
    %v427 = vunpack.c.l.b16 %v409
    %v428 = vpack.c.b16 %v425, %v424
    %v429 = vpack.c.b16 %v427, %v426
    %v433 = vsel %vm171, %v419, 0
    %435 = vmatprep.subr.bf16.mxu0 0
    %436 = vmatpush1.bf16.msra.mxu0 %v428
    %437 = vmatprep.subr.bf16.mxu0 0
    %438 = vmatpush1.bf16.msra.mxu0 %v429
    %439 = vmatprep.subr.bf16.mxu0 0
    %440 = vmatpush1.bf16.msra.mxu0 0
    %441 = vmatprep.subr.bf16.mxu0 0
    %442 = vmatpush1.bf16.msra.mxu0 0
    %443 = vmatprep.subr.bf16.mxu0 0
    %444 = vmatpush1.bf16.msra.mxu0 0
    %445 = vmatprep.subr.bf16.mxu0 0
    %446 = vmatpush1.bf16.msra.mxu0 0
    %447 = vmatprep.subr.bf16.mxu0 0
    %448 = vmatpush1.bf16.msra.mxu0 0
    %449 = vmatprep.subr.bf16.mxu0 0
    %450 = vmatpush1.bf16.msra.mxu0 0
    %451 = vmatprep.subr.bf16.mxu0 0
    %452 = vmatpush1.bf16.msra.mxu0 0
    %453 = vmatprep.subr.bf16.mxu0 0
    %454 = vmatpush1.bf16.msra.mxu0 0
    %455 = vmatprep.subr.bf16.mxu0 0
    %456 = vmatpush1.bf16.msra.mxu0 0
    %457 = vmatprep.subr.bf16.mxu0 0
    %458 = vmatpush1.bf16.msra.mxu0 0
    %459 = vmatprep.subr.bf16.mxu0 0
    %460 = vmatpush1.bf16.msra.mxu0 0
    %461 = vmatprep.subr.bf16.mxu0 0
    %462 = vmatpush1.bf16.msra.mxu0 0
    %463 = vmatprep.subr.bf16.mxu0 0
    %464 = vmatpush1.bf16.msra.mxu0 0
    %465 = vmatprep.subr.bf16.mxu0 0
    %466 = vmatpush1.bf16.msra.mxu0 0
    %467 = vmatprep.mubr.bf16.mxu0 0
    %468 = vmatmul.mubr.bf16.gmra.mrb[0].mxu0 %v433
    %v469 = vpop.f32.mrb[0].mxu0
    %v470 = vadd.f32 %v415, %v469
    %v471 = vpop.f32.mrb[0].mxu0
    %v472 = vpop.f32.mrb[0].mxu0
    %v473 = vpop.f32.mrb[0].mxu0
    %474 = vdwg.mxu0
    %475 = vst [vmem:[#allocation5] sm:$0xff] %v470
    // Predicated region
    $region34: #{tpu_custom_call.1} parent=1 // pred_check
      _
    $region35: #{tpu_custom_call.1} parent=1 // pred_check_branch
      %477 = sbr.rel (0) target = $region37
    $region36: #{tpu_custom_call.1} parent=1 // pred_region
      %s479 = ssub.s32 128, 128
      %480 = vsyncadd [#allocation4], %s479
      %s482 = sshll.u32 [#allocation5], 4
      %s483 = int_to_ptr.vmem [resolvable:$true] %s482
      %485 = dma.vmem_to_hbm [thread:$0]  %s483, 128, %s7, [#allocation4]
    $region37: #{tpu_custom_call.1} parent=1 // pred_fallthru
      _
    // Predicated region
    $region38: #{tpu_custom_call.1} parent=1 // pred_check
      _
    $region39: #{tpu_custom_call.1} parent=1 // pred_check_branch
      %487 = sbr.rel (0) target = $region41
    $region40: #{tpu_custom_call.1} parent=1 // pred_region
      %s489 = ssub.s32 128, 128
      %490 = vsyncadd [#allocation7], %s489
      %s492 = sshll.u32 [#allocation6], 4
      %s493 = int_to_ptr.vmem [resolvable:$true] %s492
      %495 = dma.vmem_to_hbm [thread:$0]  %s493, 128, %s8, [#allocation7]
    $region41: #{tpu_custom_call.1} parent=1 // pred_fallthru
      _
    // Predicated region
    $region42: #{tpu_custom_call.1} parent=1 // pred_check
      _
    $region43: #{tpu_custom_call.1} parent=1 // pred_check_branch
      %497 = sbr.rel (0) target = $region45
    $region44: #{tpu_custom_call.1} parent=1 // pred_region
      %498 = dma.done [#allocation4], 128
    $region45: #{tpu_custom_call.1} parent=1 // pred_fallthru
      _
    // Predicated region
    $region46: #{tpu_custom_call.1} parent=1 // pred_check
      _
    $region47: #{tpu_custom_call.1} parent=1 // pred_check_branch
      %500 = sbr.rel (0) target = $region49
    $region48: #{tpu_custom_call.1} parent=1 // pred_region
      %501 = dma.done [#allocation7], 128
    $region49: #{tpu_custom_call.1} parent=1 // pred_fallthru
      _
    %502 = vsyncpa [#allocation3], 1
    %503 = vsyncpa [#allocation4], 1
    %504 = vsyncpa [#allocation7], 1

</llo_original>
